<compile_context>
chip_gen: v7x
topology: tpu7x:2x2x1
jax: 0.10.0
libtpu: 0.0.40
codegen_flags: <defaults>
</compile_context>

<pallas_src>
import functools

import jax
import jax.numpy as jnp
from jax.experimental import pallas as pl
from jax.experimental.pallas import tpu as pltpu


def _proj_eval_kernel(x_ref, w_ref, b_ref, o_ref):
    # y = x @ W^T + b ; W kept in native (out, in) layout -> contract 1 vs 1.
    y = jax.lax.dot_general(
        x_ref[...], w_ref[...],
        dimension_numbers=(((1,), (1,)), ((), ())),
        preferred_element_type=jnp.float32)
    o_ref[...] = (y + b_ref[...].astype(jnp.float32)).astype(o_ref.dtype)


def _proj_train_kernel(x_ref, m_ref, w_ref, b_ref, o_ref, *, scale):
    # Dropout: zero with prob p (mask is 0/1); survivor scale 1/(1-p) folded
    # onto the (tm, tn) output tile (smaller than the (tm, in) input tile).
    h = x_ref[...] * m_ref[...]
    y = jax.lax.dot_general(
        h, w_ref[...],
        dimension_numbers=(((1,), (1,)), ((), ())),
        preferred_element_type=jnp.float32)
    o_ref[...] = (y * jnp.float32(scale)
                  + b_ref[...].astype(jnp.float32)).astype(o_ref.dtype)


def _pick_tile(dim, preferred, align):
    """Largest tile <= preferred that is a multiple of `align` and divides
    `dim`; else the full dim (full-extent blocks are always legal)."""
    if dim <= preferred:
        return dim
    t = (preferred // align) * align
    while t >= align:
        if dim % t == 0:
            return t
        t -= align
    return dim


def projection_forward(x, weight, bias, *, p_drop=0.3, training=False,
                       rng_key=None):
    """x: (B, in_size); weight: (out_size, in_size) (PyTorch layout); bias: (out_size,)."""
    B, in_size = x.shape
    out_size, in_w = weight.shape
    assert in_w == in_size, "weight must be (out_size, in_size)"
    b2 = bias.reshape(1, out_size)

    # Tile sizes: tm multiple of 8 (sublane), tn multiple of 128 (lane-dense
    # unmasked stores); full K kept per block so each (i, j) tile is final.
    tm = _pick_tile(B, 256, 8)
    tn = _pick_tile(out_size, 512, 128)
    grid = (B // tm, out_size // tn)

    x_spec = pl.BlockSpec((tm, in_size), lambda i, j: (i, 0))
    w_spec = pl.BlockSpec((tn, in_size), lambda i, j: (j, 0))  # resident across batch tiles
    b_spec = pl.BlockSpec((1, tn), lambda i, j: (0, j))
    o_spec = pl.BlockSpec((tm, tn), lambda i, j: (i, j))

    bytes_accessed = (x.size * x.dtype.itemsize
                      + weight.size * weight.dtype.itemsize
                      + bias.size * bias.dtype.itemsize
                      + B * out_size * x.dtype.itemsize)
    cost = pl.CostEstimate(flops=2 * B * in_size * out_size,
                           transcendentals=0,
                           bytes_accessed=bytes_accessed)
    cparams = pltpu.CompilerParams(
        dimension_semantics=("parallel", "parallel"))

    if training and p_drop > 0.0:
        if rng_key is None:
            rng_key = jax.random.PRNGKey(0)
        # 0/1 keep mask in x's dtype (torch.nn.Dropout training semantics).
        keep = jax.random.bernoulli(rng_key, 1.0 - p_drop, x.shape).astype(x.dtype)
        kernel = functools.partial(_proj_train_kernel,
                                   scale=1.0 / (1.0 - p_drop))
        m_spec = pl.BlockSpec((tm, in_size), lambda i, j: (i, 0))
        return pl.pallas_call(
            kernel,
            out_shape=jax.ShapeDtypeStruct((B, out_size), x.dtype),
            grid_spec=pltpu.PrefetchScalarGridSpec(
                num_scalar_prefetch=0,
                grid=grid,
                in_specs=[x_spec, m_spec, w_spec, b_spec],
                out_specs=o_spec),
            compiler_params=cparams,
            cost_estimate=cost,
        )(x, keep, weight, b2)

    return pl.pallas_call(
        _proj_eval_kernel,
        out_shape=jax.ShapeDtypeStruct((B, out_size), x.dtype),
        grid_spec=pltpu.PrefetchScalarGridSpec(
            num_scalar_prefetch=0,
            grid=grid,
            in_specs=[x_spec, w_spec, b_spec],
            out_specs=o_spec),
        compiler_params=cparams,
        cost_estimate=cost,
    )(x, weight, b2)


if __name__ == "__main__":
    # Module defaults: in_size=256, out_size=128. Small batch.
    B, IN, OUT = 8, 256, 128

    key = jax.random.PRNGKey(0)
    kx, kw, kb, kd = jax.random.split(key, 4)

    x = jax.random.normal(kx, (B, IN), dtype=jnp.float32)
    weight = jax.random.normal(kw, (OUT, IN), dtype=jnp.float32) * (1.0 / IN ** 0.5)
    bias = jax.random.normal(kb, (OUT,), dtype=jnp.float32) * 0.01

    # Eval-mode forward (dropout == identity).
    out = projection_forward(x, weight, bias, training=False)
    jax.block_until_ready(out)
    ref = x @ weight.T + bias
    assert jnp.allclose(out, ref, atol=1e-4, rtol=1e-4), "eval mismatch vs reference"

    # Training-mode forward (dropout with p=0.3), checked against the same mask.
    out_train = projection_forward(x, weight, bias, training=True, rng_key=kd)
    jax.block_until_ready(out_train)
    keep_ref = jax.random.bernoulli(kd, 0.7, x.shape).astype(x.dtype)
    ref_train = (x * keep_ref * (1.0 / 0.7)) @ weight.T + bias
    assert jnp.allclose(out_train, ref_train, atol=1e-3, rtol=1e-3), \
        "train mismatch vs reference"

    print("KERNEL_OK")
</pallas_src>

<mosaic_0001>
module attributes {stable_mosaic.version = 11 : i64} {
  func.func @_proj_eval_kernel(%arg0: i32, %arg1: i32, %arg2: memref<8x256xf32, #tpu.memory_space<vmem>>, %arg3: memref<128x256xf32, #tpu.memory_space<vmem>>, %arg4: memref<1x128xf32, #tpu.memory_space<vmem>>, %arg5: memref<8x128xf32, #tpu.memory_space<vmem>>) attributes {dimension_semantics = [#tpu.dimension_semantics<parallel>, #tpu.dimension_semantics<parallel>], iteration_bounds = array<i64: 1, 1>, scalar_prefetch = 0 : i64, scratch_operands = 0 : i64, tpu.core_type = #tpu.core_type<tc>, window_params = [{transform_indices = @transform_0, window_bounds = array<i64: 8, 256>}, {transform_indices = @transform_1, window_bounds = array<i64: 128, 256>}, {transform_indices = @transform_2, window_bounds = array<i64: 1, 128>}, {transform_indices = @transform_3, window_bounds = array<i64: 8, 128>}]} {
    %c0 = arith.constant 0 : index
    %c0_0 = arith.constant 0 : index
    %0 = vector.load %arg2[%c0, %c0_0] : memref<8x256xf32, #tpu.memory_space<vmem>>, vector<8x256xf32>
    %c0_1 = arith.constant 0 : index
    %c0_2 = arith.constant 0 : index
    %1 = vector.load %arg3[%c0_1, %c0_2] : memref<128x256xf32, #tpu.memory_space<vmem>>, vector<128x256xf32>
    %cst = arith.constant dense<0.000000e+00> : vector<8x128xf32>
    %2 = tpu.matmul %0, %1, %cst {dimension_numbers = #tpu.dot_dimension_numbers<[1], [1], [0], [0], [0, 0, 1, 0], [], []>} : vector<8x256xf32>, vector<128x256xf32>, vector<8x128xf32> -> vector<8x128xf32>
    %c0_3 = arith.constant 0 : index
    %c0_4 = arith.constant 0 : index
    %3 = vector.load %arg4[%c0_3, %c0_4] : memref<1x128xf32, #tpu.memory_space<vmem>>, vector<1x128xf32>
    %4 = vector.broadcast %3 : vector<1x128xf32> to vector<8x128xf32>
    %5 = arith.addf %2, %4 : vector<8x128xf32>
    %c0_5 = arith.constant 0 : index
    %c0_6 = arith.constant 0 : index
    %6 = vector.load %arg5[%c0_5, %c0_6] : memref<8x128xf32, #tpu.memory_space<vmem>>, vector<8x128xf32>
    tpu.vector_store %arg5[%c0_5, %c0_6], %5 {strides = array<i32>} : memref<8x128xf32, #tpu.memory_space<vmem>>, vector<8x128xf32>,
    return
  }
  func.func @transform_0(%arg0: i32, %arg1: i32) -> (i32, i32) {
    %c0_i32 = arith.constant 0 : i32
    %c0_i32_0 = arith.constant 0 : i32
    return %arg0, %c0_i32 : i32, i32
  }
  func.func @transform_1(%arg0: i32, %arg1: i32) -> (i32, i32) {
    %c0_i32 = arith.constant 0 : i32
    %c0_i32_0 = arith.constant 0 : i32
    return %arg1, %c0_i32 : i32, i32
  }
  func.func @transform_2(%arg0: i32, %arg1: i32) -> (i32, i32) {
    %c0_i32 = arith.constant 0 : i32
    %c0_i32_0 = arith.constant 0 : i32
    return %c0_i32, %arg1 : i32, i32
  }
  func.func @transform_3(%arg0: i32, %arg1: i32) -> (i32, i32) {
    %c0_i32 = arith.constant 0 : i32
    return %arg0, %arg1 : i32, i32
  }
}

</mosaic_0001>

<llo_original>
// kernel: tpu_custom_call.1
$region0: #{tpu_custom_call.1}
  #allocation0 [shape = 'u32[]', space=smem, size = 0x4, offset = 0x4, fixed_abs, tag = 'smem constant byte address 0x4 - core index']
  #allocation1 [shape = 'u32[144,128]{1,0:T(1,128)}', space=vmem, size = 0x12000, scoped, tag = 'internal scratch']
  %s0 = inlined_call_operand.hbm [shape: f32[8,256], index: 0, kind: input, shape index: {}]
  %s1 = inlined_call_operand.hbm [shape: f32[128,256], index: 1, kind: input, shape index: {}]
  %s2 = inlined_call_operand.vmem [shape: f32[1,128], index: 2, kind: input, shape index: {}]
  %s3 = inlined_call_operand.hbm [shape: f32[8,128], index: 3, kind: output, shape index: {}]
  %s4 = sld [smem:[#allocation0]]
  $region30: #{tpu_custom_call.1} parent=0
    _
  %s6 = ssub.s32 1, %s4
  %s7 = scalar_select 0, %s6, %s4
  $region1: #{tpu_custom_call.1} parent=0
    #allocation2 [shape = 'u8[8192]{0}', space=vmem, size = 0x2000, scoped, tag = 'input window, operand 0, single buffered']
    #allocation3 [shape = 's32[1]{0}', space=sflag, size = 0x4, scoped, tag = 'scoped memory for tpu_custom_call.1']
    #allocation4 [shape = 's32[1]{0}', space=sflag, size = 0x4, scoped, tag = 'scoped memory for tpu_custom_call.1']
    #allocation5 [shape = 'u8[131072]{0}', space=vmem, size = 0x20000, scoped, tag = 'input window, operand 1, single buffered']
    #allocation6 [shape = 's32[1]{0}', space=sflag, size = 0x4, scoped, tag = 'scoped memory for tpu_custom_call.1']
    #allocation7 [shape = 'u8[4096]{0}', space=vmem, size = 0x1000, scoped, tag = 'output window, operand 0, single buffered']
    %8 = vsyncpa [#allocation3], 0
    %9 = vsyncpa [#allocation6], 0
    %10 = vsyncpa [#allocation4], 0
    // Predicated region
    $region2: #{tpu_custom_call.1} parent=1 // pred_check
      _
    $region3: #{tpu_custom_call.1} parent=1 // pred_check_branch
      %12 = sbr.rel (0) target = $region5
    $region4: #{tpu_custom_call.1} parent=1 // pred_region
      %s14 = ssub.s32 256, 256
      %15 = vsyncadd [#allocation3], %s14
      %s17 = sshll.u32 [#allocation2], 4
      %s18 = int_to_ptr.vmem [resolvable:$true] %s17
      %20 = dma.hbm_to_vmem [thread:$0]  %s0, 256, %s18, [#allocation3]
    $region5: #{tpu_custom_call.1} parent=1 // pred_fallthru
      _
    // Predicated region
    $region6: #{tpu_custom_call.1} parent=1 // pred_check
      _
    $region7: #{tpu_custom_call.1} parent=1 // pred_check_branch
      %22 = sbr.rel (0) target = $region9
    $region8: #{tpu_custom_call.1} parent=1 // pred_region
      %s24 = ssub.s32 4096, 4096
      %25 = vsyncadd [#allocation6], %s24
      %s26 = sshll.u32 [#allocation5], 4
      %s27 = int_to_ptr.vmem [resolvable:$true] %s26
      %32 = dma.hbm_to_vmem [thread:$0]  %s1, 4096, %s27, [#allocation6], 256, 256, 16
    $region9: #{tpu_custom_call.1} parent=1 // pred_fallthru
      _
    // Predicated region
    $region10: #{tpu_custom_call.1} parent=1 // pred_check
      _
    $region11: #{tpu_custom_call.1} parent=1 // pred_check_branch
      %34 = sbr.rel (0) target = $region13
    $region12: #{tpu_custom_call.1} parent=1 // pred_region
      _
    $region13: #{tpu_custom_call.1} parent=1 // pred_fallthru
      _
    // Predicated region
    $region14: #{tpu_custom_call.1} parent=1 // pred_check
      _
    $region15: #{tpu_custom_call.1} parent=1 // pred_check_branch
      %36 = sbr.rel (0) target = $region17
    $region16: #{tpu_custom_call.1} parent=1 // pred_region
      %37 = dma.done [#allocation3], 256
    $region17: #{tpu_custom_call.1} parent=1 // pred_fallthru
      _
    // Predicated region
    $region18: #{tpu_custom_call.1} parent=1 // pred_check
      _
    $region19: #{tpu_custom_call.1} parent=1 // pred_check_branch
      %39 = sbr.rel (0) target = $region21
    $region20: #{tpu_custom_call.1} parent=1 // pred_region
      %40 = dma.done [#allocation6], 4096
    $region21: #{tpu_custom_call.1} parent=1 // pred_fallthru
      _
    %v41 = vld [vmem:[#allocation2] sm:$0xff]
    %v42 = vld [vmem:[#allocation2 + $0x8] sm:$0xff]
    %v43 = vld [vmem:[#allocation5] sm:$0xff]
    %v44 = vld [vmem:[#allocation5 + $0x8] sm:$0xff]
    %v45 = vld [vmem:[#allocation5 + $0x10] sm:$0xff]
    %v46 = vld [vmem:[#allocation5 + $0x18] sm:$0xff]
    %v47 = vld [vmem:[#allocation5 + $0x20] sm:$0xff]
    %v48 = vld [vmem:[#allocation5 + $0x28] sm:$0xff]
    %v49 = vld [vmem:[#allocation5 + $0x30] sm:$0xff]
    %v50 = vld [vmem:[#allocation5 + $0x38] sm:$0xff]
    %v51 = vld [vmem:[#allocation5 + $0x40] sm:$0xff]
    %v52 = vld [vmem:[#allocation5 + $0x48] sm:$0xff]
    %v53 = vld [vmem:[#allocation5 + $0x50] sm:$0xff]
    %v54 = vld [vmem:[#allocation5 + $0x58] sm:$0xff]
    %v55 = vld [vmem:[#allocation5 + $0x60] sm:$0xff]
    %v56 = vld [vmem:[#allocation5 + $0x68] sm:$0xff]
    %v57 = vld [vmem:[#allocation5 + $0x70] sm:$0xff]
    %v58 = vld [vmem:[#allocation5 + $0x78] sm:$0xff]
    %v59 = vld [vmem:[#allocation5 + $0x80] sm:$0xff]
    %v60 = vld [vmem:[#allocation5 + $0x88] sm:$0xff]
    %v61 = vld [vmem:[#allocation5 + $0x90] sm:$0xff]
    %v62 = vld [vmem:[#allocation5 + $0x98] sm:$0xff]
    %v63 = vld [vmem:[#allocation5 + $0xa0] sm:$0xff]
    %v64 = vld [vmem:[#allocation5 + $0xa8] sm:$0xff]
    %v65 = vld [vmem:[#allocation5 + $0xb0] sm:$0xff]
    %v66 = vld [vmem:[#allocation5 + $0xb8] sm:$0xff]
    %v67 = vld [vmem:[#allocation5 + $0xc0] sm:$0xff]
    %v68 = vld [vmem:[#allocation5 + $0xc8] sm:$0xff]
    %v69 = vld [vmem:[#allocation5 + $0xd0] sm:$0xff]
    %v70 = vld [vmem:[#allocation5 + $0xd8] sm:$0xff]
    %v71 = vld [vmem:[#allocation5 + $0xe0] sm:$0xff]
    %v72 = vld [vmem:[#allocation5 + $0xe8] sm:$0xff]
    %v73 = vld [vmem:[#allocation5 + $0xf0] sm:$0xff]
    %v74 = vld [vmem:[#allocation5 + $0xf8] sm:$0xff]
    %v75 = vld [vmem:[%s2] sm:$0x1]
    %v77 = vlaneseq
    %v78 = vshrl.u32 %v77, 7
    %v79 = vsub.s32 0, %v78
    %v80 = vrot.slane %v75, %v79
    %82 = vmatprep.subr.mxu0 %v44
    %83 = vmatpush1.xpose.msra.mxu0 %v43
    %84 = vmatprep.subr.mxu0 %v46
    %85 = vmatpush1.xpose.msra.mxu0 %v45
    %86 = vmatprep.subr.mxu0 %v48
    %87 = vmatpush1.xpose.msra.mxu0 %v47
    %88 = vmatprep.subr.mxu0 %v50
    %89 = vmatpush1.xpose.msra.mxu0 %v49
    %90 = vmatprep.subr.mxu0 %v52
    %91 = vmatpush1.xpose.msra.mxu0 %v51
    %92 = vmatprep.subr.mxu0 %v54
    %93 = vmatpush1.xpose.msra.mxu0 %v53
    %94 = vmatprep.subr.mxu0 %v56
    %95 = vmatpush1.xpose.msra.mxu0 %v55
    %96 = vmatprep.subr.mxu0 %v58
    %97 = vmatpush1.xpose.msra.mxu0 %v57
    %98 = vmatprep.subr.mxu0 %v60
    %99 = vmatpush1.xpose.msra.mxu0 %v59
    %100 = vmatprep.subr.mxu0 %v62
    %101 = vmatpush1.xpose.msra.mxu0 %v61
    %102 = vmatprep.subr.mxu0 %v64
    %103 = vmatpush1.xpose.msra.mxu0 %v63
    %104 = vmatprep.subr.mxu0 %v66
    %105 = vmatpush1.xpose.msra.mxu0 %v65
    %106 = vmatprep.subr.mxu0 %v68
    %107 = vmatpush1.xpose.msra.mxu0 %v67
    %108 = vmatprep.subr.mxu0 %v70
    %109 = vmatpush1.xpose.msra.mxu0 %v69
    %110 = vmatprep.subr.mxu0 %v72
    %111 = vmatpush1.xpose.msra.mxu0 %v71
    %112 = vmatprep.subr.mxu0 %v74
    %113 = vmatpush1.xpose.msra.mxu0 %v73
    %114 = vmatprep.subr.mxu0 0.0
    %115 = vmatpush1.xpose.msra.mxu0 0.0
    %116 = vmatprep.subr.mxu0 0.0
    %117 = vmatpush1.xpose.msra.mxu0 0.0
    %118 = vmatprep.subr.mxu0 0.0
    %119 = vmatpush1.xpose.msra.mxu0 0.0
    %120 = vmatprep.subr.mxu0 0.0
    %121 = vmatpush1.xpose.msra.mxu0 0.0
    %122 = vmatprep.subr.mxu0 0.0
    %123 = vmatpush1.xpose.msra.mxu0 0.0
    %124 = vmatprep.subr.mxu0 0.0
    %125 = vmatpush1.xpose.msra.mxu0 0.0
    %126 = vmatprep.subr.mxu0 0.0
    %127 = vmatpush1.xpose.msra.mxu0 0.0
    %128 = vmatprep.subr.mxu0 0.0
    %129 = vmatpush1.xpose.msra.mxu0 0.0
    %130 = vmatprep.subr.mxu0 0.0
    %131 = vmatpush1.xpose.msra.mxu0 0.0
    %132 = vmatprep.subr.mxu0 0.0
    %133 = vmatpush1.xpose.msra.mxu0 0.0
    %134 = vmatprep.subr.mxu0 0.0
    %135 = vmatpush1.xpose.msra.mxu0 0.0
    %136 = vmatprep.subr.mxu0 0.0
    %137 = vmatpush1.xpose.msra.mxu0 0.0
    %138 = vmatprep.subr.mxu0 0.0
    %139 = vmatpush1.xpose.msra.mxu0 0.0
    %140 = vmatprep.subr.mxu0 0.0
    %141 = vmatpush1.xpose.msra.mxu0 0.0
    %142 = vmatprep.subr.mxu0 0.0
    %143 = vmatpush1.xpose.msra.mxu0 0.0
    %144 = vmatprep.subr.mxu0 0.0
    %145 = vmatpush1.xpose.msra.mxu0 0.0
    %146 = vmatprep.mubr.f32.mxu0 %v42
    %147 = vmatmul.mubr.f32.gmra.mrb[0].mxu0 %v41
    %v148 = vpop.f32.mrb[0].mxu0
    %v149 = vadd.f32 %v80, %v148
    %v150 = vpop.f32.mrb[0].mxu0
    %151 = vdwg.mxu0
    %152 = vst [vmem:[#allocation7] sm:$0xff] %v149
    // Predicated region
    $region22: #{tpu_custom_call.1} parent=1 // pred_check
      _
    $region23: #{tpu_custom_call.1} parent=1 // pred_check_branch
      %154 = sbr.rel (0) target = $region25
    $region24: #{tpu_custom_call.1} parent=1 // pred_region
      %s156 = ssub.s32 128, 128
      %157 = vsyncadd [#allocation4], %s156
      %s159 = sshll.u32 [#allocation7], 4
      %s160 = int_to_ptr.vmem [resolvable:$true] %s159
      %162 = dma.vmem_to_hbm [thread:$0]  %s160, 128, %s3, [#allocation4]
    $region25: #{tpu_custom_call.1} parent=1 // pred_fallthru
      _
    // Predicated region
    $region26: #{tpu_custom_call.1} parent=1 // pred_check
      _
    $region27: #{tpu_custom_call.1} parent=1 // pred_check_branch
      %164 = sbr.rel (0) target = $region29
    $region28: #{tpu_custom_call.1} parent=1 // pred_region
      %165 = dma.done [#allocation4], 128
    $region29: #{tpu_custom_call.1} parent=1 // pred_fallthru
      _
    %166 = vsyncpa [#allocation3], 1
    %167 = vsyncpa [#allocation6], 1
    %168 = vsyncpa [#allocation4], 1

</llo_original>
